<compile_context>
chip_gen: v7x
topology: tpu7x:2x2x1
jax: 0.10.0
libtpu: 0.0.40
codegen_flags: <defaults>
</compile_context>

<pallas_src>
import functools

import jax
import jax.numpy as jnp
from jax.experimental import pallas as pl
from jax.experimental.pallas import tpu as pltpu

LANE = 128


def _round_up(x: int, m: int) -> int:
    return ((x + m - 1) // m) * m


def _sublane_granule(dtype) -> int:
    # 8 sublanes of 32-bit; sub-32-bit dtypes pack along sublanes.
    return max(8, 32 // jnp.dtype(dtype).itemsize)


def _vmem_capacity_bytes() -> int:
    try:
        return int(pltpu.get_tpu_info().vmem_capacity_bytes)
    except Exception:
        return 64 * 1024 * 1024  # conservative default (v7x per-TensorCore)


def _choose_tile(dim_padded: int, granule: int, target: int) -> int:
    """Largest multiple of `granule` that divides `dim_padded` and is <= target."""
    target = max(granule, min(target, dim_padded))
    if dim_padded <= target:
        return dim_padded
    q = dim_padded // granule
    best = granule
    for d in range(1, q + 1):
        cand = d * granule
        if q % d == 0 and cand <= target:
            best = cand
    return best


def _plan_tiles(B, Kp, Np, *, x_it, w_it, b_it, o_it, granule,
                tm_t, tn_t, tk_t, budget, resident_limit):
    """Pick (resident?, tm, tn, tk) so the double-buffered working set fits VMEM."""
    w_bytes = Kp * Np * w_it

    # Weight-resident plan: full K/N blocks, 1-D grid over M, no accumulator
    # scratch, no per-k read-modify-write, weight DMA'd once.
    if w_bytes <= resident_limit:
        t_m = max(granule, min(_round_up(tm_t, granule), _round_up(B, granule)))
        while True:
            vm = (2 * t_m * Kp * x_it + 2 * w_bytes + 2 * Np * b_it
                  + 2 * t_m * Np * o_it)
            if vm <= budget:
                return True, t_m, Np, Kp
            if t_m <= granule:
                break
            t_m = max(granule, _round_up(t_m // 2, granule))

    # Tiled plan: shrink targets until the working set fits the budget.
    tm_c, tn_c, tk_c = tm_t, tn_t, tk_t
    while True:
        t_m = max(granule, min(_round_up(tm_c, granule), _round_up(B, granule)))
        t_n = _choose_tile(Np, LANE, tn_c)
        t_k = _choose_tile(Kp, LANE, tk_c)
        vm = (2 * t_m * t_k * x_it + 2 * t_k * t_n * w_it + 2 * t_n * b_it
              + 2 * t_m * t_n * o_it + t_m * t_n * 4)  # + f32 accumulator
        if vm <= budget or (t_m <= granule and t_n <= LANE and t_k <= LANE):
            return False, t_m, t_n, t_k
        tm_c = max(granule, tm_c // 2)
        tn_c = max(LANE, tn_c // 2)
        tk_c = max(LANE, tk_c // 2)


def _gemm_bias_kernel_resident(x_ref, w_ref, b_ref, o_ref):
    # Full K and N resident in VMEM; one M tile per grid step.
    acc = jnp.dot(x_ref[...], w_ref[...], preferred_element_type=jnp.float32)
    o_ref[...] = (acc + b_ref[...]).astype(o_ref.dtype)


def _gemm_bias_kernel_tiled(x_ref, w_ref, b_ref, o_ref, acc_ref):
    k = pl.program_id(2)

    @pl.when(k == 0)
    def _():
        acc_ref[...] = jnp.zeros_like(acc_ref)

    acc_ref[...] += jnp.dot(x_ref[...], w_ref[...],
                            preferred_element_type=jnp.float32)

    @pl.when(k == pl.num_programs(2) - 1)
    def _():
        # Bias added exactly once, cast at the store.
        o_ref[...] = (acc_ref[...] + b_ref[...]).astype(o_ref.dtype)


def pad_params(w, b):
    """Pad W.T (K, N) and bias to lane-dense 128 multiples. Call ONCE at
    parameter-load time; the padded arrays are reused by every forward call."""
    K, N = w.shape
    Kp, Np = _round_up(K, LANE), _round_up(N, LANE)
    wp = w if (Kp, Np) == (K, N) else jnp.zeros((Kp, Np), w.dtype).at[:K, :N].set(w)
    bp = jnp.zeros((1, Np), b.dtype).at[0, :N].set(b)
    return wp, bp


def _aux_head_forward(x, wp, bp, *, n_out, tm, tn, tk,
                      max_resident_weight_bytes, use_xla_for_tiny):
    lead = x.shape[:-1]
    K = x.shape[-1]
    x2 = x.reshape(-1, K)
    B = x2.shape[0]
    Kp, Np = wp.shape
    assert K <= Kp and n_out <= Np

    # Optional tiny-problem fallback: a fused XLA dot beats Pallas launch +
    # pipeline setup at trivially small sizes.
    if use_xla_for_tiny and 2 * B * Kp * Np < (1 << 22):
        out = jnp.dot(x2, wp[:K, :n_out], preferred_element_type=jnp.float32)
        out = (out + bp[0, :n_out].astype(jnp.float32)).astype(x.dtype)
        return out.reshape(lead + (n_out,))

    granule = _sublane_granule(x.dtype)
    x_it = jnp.dtype(x.dtype).itemsize
    w_it = jnp.dtype(wp.dtype).itemsize
    b_it = jnp.dtype(bp.dtype).itemsize
    o_it = x_it

    capacity = _vmem_capacity_bytes()
    budget = (capacity * 3) // 4  # ~25% headroom (≈96 MiB v5e/v6e, ≈48 MiB v7x)
    resident_limit = (budget // 3 if max_resident_weight_bytes is None
                      else max_resident_weight_bytes)

    resident, tm_e, tn_e, tk_e = _plan_tiles(
        B, Kp, Np, x_it=x_it, w_it=w_it, b_it=b_it, o_it=o_it, granule=granule,
        tm_t=tm, tn_t=tn, tk_t=tk, budget=budget, resident_limit=resident_limit)

    Bp = _round_up(B, tm_e)
    xp = x2
    if (Bp, Kp) != (B, K):
        # Zero-padding is exact: padded K contributes 0, padded rows sliced off.
        xp = jnp.zeros((Bp, Kp), x.dtype).at[:B, :K].set(x2)

    cost = pl.CostEstimate(
        flops=2 * Bp * Kp * Np,
        bytes_accessed=Bp * Kp * x_it + Kp * Np * w_it + Np * b_it + Bp * Np * o_it,
        transcendentals=0)

    # TODO(synk): on v7x, marking the M axis pltpu.CORE_PARALLEL (or an explicit
    # pl.core_map split) is needed to use both TensorCores; "parallel" is kept
    # here so the same code lowers cleanly on single-core v5e/v6e.
    if resident:
        out_p = pl.pallas_call(
            _gemm_bias_kernel_resident,
            out_shape=jax.ShapeDtypeStruct((Bp, Np), x.dtype),
            grid_spec=pltpu.PrefetchScalarGridSpec(
                num_scalar_prefetch=0,
                grid=(Bp // tm_e,),
                in_specs=[
                    pl.BlockSpec((tm_e, Kp), lambda i: (i, 0)),
                    pl.BlockSpec((Kp, Np), lambda i: (0, 0)),
                    pl.BlockSpec((1, Np), lambda i: (0, 0)),
                ],
                out_specs=pl.BlockSpec((tm_e, Np), lambda i: (i, 0)),
            ),
            compiler_params=pltpu.CompilerParams(
                dimension_semantics=("parallel",),
                vmem_limit_bytes=int(budget)),
            cost_estimate=cost,
        )(xp, wp, bp)
    else:
        out_p = pl.pallas_call(
            _gemm_bias_kernel_tiled,
            out_shape=jax.ShapeDtypeStruct((Bp, Np), x.dtype),
            grid_spec=pltpu.PrefetchScalarGridSpec(
                num_scalar_prefetch=0,
                grid=(Bp // tm_e, Np // tn_e, Kp // tk_e),
                in_specs=[
                    pl.BlockSpec((tm_e, tk_e), lambda i, j, k: (i, k)),
                    pl.BlockSpec((tk_e, tn_e), lambda i, j, k: (k, j)),
                    pl.BlockSpec((1, tn_e), lambda i, j, k: (0, j)),
                ],
                out_specs=pl.BlockSpec((tm_e, tn_e), lambda i, j, k: (i, j)),
                scratch_shapes=[pltpu.VMEM((tm_e, tn_e), jnp.float32)],
            ),
            compiler_params=pltpu.CompilerParams(
                dimension_semantics=("parallel", "parallel", "arbitrary"),
                vmem_limit_bytes=int(budget)),
            cost_estimate=cost,
        )(xp, wp, bp)

    return out_p[:B, :n_out].reshape(lead + (n_out,))


def make_aux_head(w, b, *, tm: int = 512, tn: int = 1024, tk: int = 1024,
                  max_resident_weight_bytes=None, use_xla_for_tiny: bool = False):
    """Build a jitted AuxHead forward: x -> x @ w + b.

    w: (in_features, out_features) == W.T of the PyTorch nn.Linear weight.
    b: (out_features,)
    Padded weight/bias are built once here (not per forward call).
    """
    n_out = int(b.shape[0])
    wp, bp = pad_params(w, b)
    fwd = functools.partial(
        _aux_head_forward, n_out=n_out, tm=tm, tn=tn, tk=tk,
        max_resident_weight_bytes=max_resident_weight_bytes,
        use_xla_for_tiny=use_xla_for_tiny)

    @jax.jit
    def forward(x):
        return fwd(x, wp, bp)

    return forward


if __name__ == "__main__":
    key = jax.random.PRNGKey(0)

    # --- Test 1: small shapes consistent with the module's forward -----------
    # logits: (batch=8, in_features=32), out_features=16. Weight-resident path.
    B, K, N = 8, 32, 16
    kx, kw, kb = jax.random.split(key, 3)
    x = jax.random.normal(kx, (B, K), dtype=jnp.float32)
    w = jax.random.uniform(kw, (K, N), dtype=jnp.float32,
                           minval=-1.0, maxval=1.0) / jnp.sqrt(K)
    b = jax.random.uniform(kb, (N,), dtype=jnp.float32,
                           minval=-1.0, maxval=1.0) / jnp.sqrt(K)

    head = make_aux_head(w, b)
    out = jax.block_until_ready(head(x))
    ref = x @ w + b[None, :]
    assert out.shape == (B, N)
    assert jnp.allclose(out, ref, atol=1e-5, rtol=1e-5)

    # Tiny-problem XLA fallback path (optional) matches too.
    head_tiny = make_aux_head(w, b, use_xla_for_tiny=True)
    out_t = jax.block_until_ready(head_tiny(x))
    assert jnp.allclose(out_t, ref, atol=1e-5, rtol=1e-5)

    # --- Test 2: ragged multi-tile problem, tiled accumulator path -----------
    # Forcing the tiled path (max_resident_weight_bytes=0) exercises the k loop,
    # pl.when init/epilogue and granule-only (not tile-multiple) padding.
    B2, K2, N2 = 300, 1100, 700
    x2 = jax.random.normal(jax.random.PRNGKey(1), (B2, K2), dtype=jnp.float32)
    w2 = jax.random.normal(jax.random.PRNGKey(2), (K2, N2),
                           dtype=jnp.float32) / jnp.sqrt(K2)
    b2 = jax.random.normal(jax.random.PRNGKey(3), (N2,), dtype=jnp.float32)
    head2 = make_aux_head(w2, b2, tn=256, tk=512, max_resident_weight_bytes=0)
    out2 = jax.block_until_ready(head2(x2))
    ref2 = x2 @ w2 + b2[None, :]
    assert out2.shape == (B2, N2)
    assert jnp.allclose(out2, ref2, atol=2e-3, rtol=2e-3)

    # --- Test 3: bf16 operands (dtype-aware sublane granule = 16) ------------
    B3, K3, N3 = 50, 384, 250
    x3 = jax.random.normal(jax.random.PRNGKey(4), (B3, K3)).astype(jnp.bfloat16)
    w3 = (jax.random.normal(jax.random.PRNGKey(5), (K3, N3))
          / jnp.sqrt(K3)).astype(jnp.bfloat16)
    b3 = jax.random.normal(jax.random.PRNGKey(6), (N3,)).astype(jnp.bfloat16)
    head3 = make_aux_head(w3, b3)
    out3 = jax.block_until_ready(head3(x3))
    ref3 = (x3.astype(jnp.float32) @ w3.astype(jnp.float32)
            + b3.astype(jnp.float32)[None, :])
    assert out3.shape == (B3, N3)
    assert jnp.allclose(out3.astype(jnp.float32), ref3, atol=5e-2, rtol=5e-2)

    print("KERNEL_OK")
</pallas_src>

<mosaic_0001>
module attributes {stable_mosaic.version = 11 : i64} {
  func.func @_gemm_bias_kernel_resident(%arg0: i32, %arg1: memref<8x128xf32, #tpu.memory_space<vmem>>, %arg2: memref<128x128xf32, #tpu.memory_space<vmem>>, %arg3: memref<1x128xf32, #tpu.memory_space<vmem>>, %arg4: memref<8x128xf32, #tpu.memory_space<vmem>>) attributes {dimension_semantics = [#tpu.dimension_semantics<parallel>], iteration_bounds = array<i64: 1>, scalar_prefetch = 0 : i64, scratch_operands = 0 : i64, tpu.core_type = #tpu.core_type<tc>, window_params = [{transform_indices = @transform_0, window_bounds = array<i64: 8, 128>}, {pipeline_mode = #tpu.pipeline_mode<synchronous>, transform_indices = @transform_1, window_bounds = array<i64: 128, 128>}, {pipeline_mode = #tpu.pipeline_mode<synchronous>, transform_indices = @transform_2, window_bounds = array<i64: 1, 128>}, {transform_indices = @transform_3, window_bounds = array<i64: 8, 128>}]} {
    %c0 = arith.constant 0 : index
    %c0_0 = arith.constant 0 : index
    %0 = vector.load %arg1[%c0, %c0_0] : memref<8x128xf32, #tpu.memory_space<vmem>>, vector<8x128xf32>
    %c0_1 = arith.constant 0 : index
    %c0_2 = arith.constant 0 : index
    %1 = vector.load %arg2[%c0_1, %c0_2] : memref<128x128xf32, #tpu.memory_space<vmem>>, vector<128x128xf32>
    %cst = arith.constant dense<0.000000e+00> : vector<8x128xf32>
    %2 = tpu.matmul %0, %1, %cst {dimension_numbers = #tpu.dot_dimension_numbers<[1], [0], [0], [1], [0, 0, 1, 1], [], []>} : vector<8x128xf32>, vector<128x128xf32>, vector<8x128xf32> -> vector<8x128xf32>
    %c0_3 = arith.constant 0 : index
    %c0_4 = arith.constant 0 : index
    %3 = vector.load %arg3[%c0_3, %c0_4] : memref<1x128xf32, #tpu.memory_space<vmem>>, vector<1x128xf32>
    %4 = vector.broadcast %3 : vector<1x128xf32> to vector<8x128xf32>
    %5 = arith.addf %2, %4 : vector<8x128xf32>
    %c0_5 = arith.constant 0 : index
    %c0_6 = arith.constant 0 : index
    %6 = vector.load %arg4[%c0_5, %c0_6] : memref<8x128xf32, #tpu.memory_space<vmem>>, vector<8x128xf32>
    tpu.vector_store %arg4[%c0_5, %c0_6], %5 {strides = array<i32>} : memref<8x128xf32, #tpu.memory_space<vmem>>, vector<8x128xf32>,
    return
  }
  func.func @transform_0(%arg0: i32) -> (i32, i32) {
    %c0_i32 = arith.constant 0 : i32
    %c0_i32_0 = arith.constant 0 : i32
    return %arg0, %c0_i32 : i32, i32
  }
  func.func @transform_1(%arg0: i32) -> (i32, i32) {
    %c0_i32 = arith.constant 0 : i32
    %c0_i32_0 = arith.constant 0 : i32
    %c0_i32_1 = arith.constant 0 : i32
    return %c0_i32, %c0_i32_0 : i32, i32
  }
  func.func @transform_2(%arg0: i32) -> (i32, i32) {
    %c0_i32 = arith.constant 0 : i32
    %c0_i32_0 = arith.constant 0 : i32
    %c0_i32_1 = arith.constant 0 : i32
    return %c0_i32, %c0_i32_0 : i32, i32
  }
  func.func @transform_3(%arg0: i32) -> (i32, i32) {
    %c0_i32 = arith.constant 0 : i32
    %c0_i32_0 = arith.constant 0 : i32
    return %arg0, %c0_i32 : i32, i32
  }
}

</mosaic_0001>

<llo_original>
// kernel: forward.1
$region0: #{forward.1}
  #allocation0 [shape = 'u32[]', space=smem, size = 0x4, offset = 0x4, fixed_abs, tag = 'smem constant byte address 0x4 - core index']
  #allocation1 [shape = 'u32[144,128]{1,0:T(1,128)}', space=vmem, size = 0x12000, scoped, tag = 'internal scratch']
  %s0 = inlined_call_operand.vmem [shape: f32[8,128], index: 0, kind: input, shape index: {}]
  %s1 = inlined_call_operand.hbm [shape: f32[128,128], index: 1, kind: input, shape index: {}]
  %s2 = inlined_call_operand.vmem [shape: f32[1,128], index: 2, kind: input, shape index: {}]
  %s3 = inlined_call_operand.hbm [shape: f32[8,128], index: 3, kind: output, shape index: {}]
  %s4 = sld [smem:[#allocation0]]
  $region26: #{forward.1} parent=0
    _
  %s6 = ssub.s32 1, %s4
  %s7 = scalar_select 0, %s6, %s4
  $region1: #{forward.1} parent=0
    #allocation2 [shape = 'u8[65536]{0}', space=vmem, size = 0x10000, scoped, tag = 'input window, operand 1, single buffered']
    #allocation3 [shape = 's32[1]{0}', space=sflag, size = 0x4, scoped, tag = 'scoped memory for forward.1']
    #allocation4 [shape = 's32[1]{0}', space=sflag, size = 0x4, scoped, tag = 'scoped memory for forward.1']
    #allocation5 [shape = 'u8[4096]{0}', space=vmem, size = 0x1000, scoped, tag = 'output window, operand 0, single buffered']
    %8 = vsyncpa [#allocation3], 0
    %9 = vsyncpa [#allocation4], 0
    // Predicated region
    $region2: #{forward.1} parent=1 // pred_check
      _
    $region3: #{forward.1} parent=1 // pred_check_branch
      %11 = sbr.rel (0) target = $region5
    $region4: #{forward.1} parent=1 // pred_region
      _
    $region5: #{forward.1} parent=1 // pred_fallthru
      _
    // Predicated region
    $region6: #{forward.1} parent=1 // pred_check
      _
    $region7: #{forward.1} parent=1 // pred_check_branch
      %13 = sbr.rel (0) target = $region9
    $region8: #{forward.1} parent=1 // pred_region
      %s15 = ssub.s32 2048, 2048
      %16 = vsyncadd [#allocation3], %s15
      %s17 = sshll.u32 [#allocation2], 4
      %s18 = int_to_ptr.vmem [resolvable:$true] %s17
      %23 = dma.hbm_to_vmem [thread:$0]  %s1, 2048, %s18, [#allocation3], 128, 128, 8
    $region9: #{forward.1} parent=1 // pred_fallthru
      _
    // Predicated region
    $region10: #{forward.1} parent=1 // pred_check
      _
    $region11: #{forward.1} parent=1 // pred_check_branch
      %25 = sbr.rel (0) target = $region13
    $region12: #{forward.1} parent=1 // pred_region
      _
    $region13: #{forward.1} parent=1 // pred_fallthru
      _
    // Predicated region
    $region14: #{forward.1} parent=1 // pred_check
      _
    $region15: #{forward.1} parent=1 // pred_check_branch
      %27 = sbr.rel (0) target = $region17
    $region16: #{forward.1} parent=1 // pred_region
      %28 = dma.done [#allocation3], 2048
    $region17: #{forward.1} parent=1 // pred_fallthru
      _
    %v29 = vld [vmem:[%s0] sm:$0xff]
    %v30 = vld [vmem:[#allocation2] sm:$0xff]
    %v31 = vld [vmem:[#allocation2 + $0x8] sm:$0xff]
    %v32 = vld [vmem:[#allocation2 + $0x10] sm:$0xff]
    %v33 = vld [vmem:[#allocation2 + $0x18] sm:$0xff]
    %v34 = vld [vmem:[#allocation2 + $0x20] sm:$0xff]
    %v35 = vld [vmem:[#allocation2 + $0x28] sm:$0xff]
    %v36 = vld [vmem:[#allocation2 + $0x30] sm:$0xff]
    %v37 = vld [vmem:[#allocation2 + $0x38] sm:$0xff]
    %v38 = vld [vmem:[#allocation2 + $0x40] sm:$0xff]
    %v39 = vld [vmem:[#allocation2 + $0x48] sm:$0xff]
    %v40 = vld [vmem:[#allocation2 + $0x50] sm:$0xff]
    %v41 = vld [vmem:[#allocation2 + $0x58] sm:$0xff]
    %v42 = vld [vmem:[#allocation2 + $0x60] sm:$0xff]
    %v43 = vld [vmem:[#allocation2 + $0x68] sm:$0xff]
    %v44 = vld [vmem:[#allocation2 + $0x70] sm:$0xff]
    %v45 = vld [vmem:[#allocation2 + $0x78] sm:$0xff]
    %v46 = vld [vmem:[%s2] sm:$0x1]
    %v48 = vlaneseq
    %v49 = vshrl.u32 %v48, 7
    %v50 = vsub.s32 0, %v49
    %v51 = vrot.slane %v46, %v50
    %53 = vmatprep.subr.mxu0 0.0
    %54 = vmatpush1.msra.mxu0 %v30
    %55 = vmatprep.subr.mxu0 0.0
    %56 = vmatpush1.msra.mxu0 %v31
    %57 = vmatprep.subr.mxu0 0.0
    %58 = vmatpush1.msra.mxu0 %v32
    %59 = vmatprep.subr.mxu0 0.0
    %60 = vmatpush1.msra.mxu0 %v33
    %61 = vmatprep.subr.mxu0 0.0
    %62 = vmatpush1.msra.mxu0 %v34
    %63 = vmatprep.subr.mxu0 0.0
    %64 = vmatpush1.msra.mxu0 %v35
    %65 = vmatprep.subr.mxu0 0.0
    %66 = vmatpush1.msra.mxu0 %v36
    %67 = vmatprep.subr.mxu0 0.0
    %68 = vmatpush1.msra.mxu0 %v37
    %69 = vmatprep.subr.mxu0 0.0
    %70 = vmatpush1.msra.mxu0 %v38
    %71 = vmatprep.subr.mxu0 0.0
    %72 = vmatpush1.msra.mxu0 %v39
    %73 = vmatprep.subr.mxu0 0.0
    %74 = vmatpush1.msra.mxu0 %v40
    %75 = vmatprep.subr.mxu0 0.0
    %76 = vmatpush1.msra.mxu0 %v41
    %77 = vmatprep.subr.mxu0 0.0
    %78 = vmatpush1.msra.mxu0 %v42
    %79 = vmatprep.subr.mxu0 0.0
    %80 = vmatpush1.msra.mxu0 %v43
    %81 = vmatprep.subr.mxu0 0.0
    %82 = vmatpush1.msra.mxu0 %v44
    %83 = vmatprep.subr.mxu0 0.0
    %84 = vmatpush1.msra.mxu0 %v45
    %85 = vmatprep.subr.mxu0 0.0
    %86 = vmatpush1.msra.mxu0 0.0
    %87 = vmatprep.subr.mxu0 0.0
    %88 = vmatpush1.msra.mxu0 0.0
    %89 = vmatprep.subr.mxu0 0.0
    %90 = vmatpush1.msra.mxu0 0.0
    %91 = vmatprep.subr.mxu0 0.0
    %92 = vmatpush1.msra.mxu0 0.0
    %93 = vmatprep.subr.mxu0 0.0
    %94 = vmatpush1.msra.mxu0 0.0
    %95 = vmatprep.subr.mxu0 0.0
    %96 = vmatpush1.msra.mxu0 0.0
    %97 = vmatprep.subr.mxu0 0.0
    %98 = vmatpush1.msra.mxu0 0.0
    %99 = vmatprep.subr.mxu0 0.0
    %100 = vmatpush1.msra.mxu0 0.0
    %101 = vmatprep.subr.mxu0 0.0
    %102 = vmatpush1.msra.mxu0 0.0
    %103 = vmatprep.subr.mxu0 0.0
    %104 = vmatpush1.msra.mxu0 0.0
    %105 = vmatprep.subr.mxu0 0.0
    %106 = vmatpush1.msra.mxu0 0.0
    %107 = vmatprep.subr.mxu0 0.0
    %108 = vmatpush1.msra.mxu0 0.0
    %109 = vmatprep.subr.mxu0 0.0
    %110 = vmatpush1.msra.mxu0 0.0
    %111 = vmatprep.subr.mxu0 0.0
    %112 = vmatpush1.msra.mxu0 0.0
    %113 = vmatprep.subr.mxu0 0.0
    %114 = vmatpush1.msra.mxu0 0.0
    %115 = vmatprep.subr.mxu0 0.0
    %116 = vmatpush1.msra.mxu0 0.0
    %117 = vmatprep.mubr.f32.mxu0 0.0
    %118 = vmatmul.mubr.f32.gmra.mrb[0].mxu0 %v29
    %v119 = vpop.f32.mrb[0].mxu0
    %v120 = vadd.f32 %v51, %v119
    %v121 = vpop.f32.mrb[0].mxu0
    %122 = vdwg.mxu0
    %123 = vst [vmem:[#allocation5] sm:$0xff] %v120
    // Predicated region
    $region18: #{forward.1} parent=1 // pred_check
      _
    $region19: #{forward.1} parent=1 // pred_check_branch
      %125 = sbr.rel (0) target = $region21
    $region20: #{forward.1} parent=1 // pred_region
      %s127 = ssub.s32 128, 128
      %128 = vsyncadd [#allocation4], %s127
      %s130 = sshll.u32 [#allocation5], 4
      %s131 = int_to_ptr.vmem [resolvable:$true] %s130
      %133 = dma.vmem_to_hbm [thread:$0]  %s131, 128, %s3, [#allocation4]
    $region21: #{forward.1} parent=1 // pred_fallthru
      _
    // Predicated region
    $region22: #{forward.1} parent=1 // pred_check
      _
    $region23: #{forward.1} parent=1 // pred_check_branch
      %135 = sbr.rel (0) target = $region25
    $region24: #{forward.1} parent=1 // pred_region
      %136 = dma.done [#allocation4], 128
    $region25: #{forward.1} parent=1 // pred_fallthru
      _
    %137 = vsyncpa [#allocation3], 1
    %138 = vsyncpa [#allocation4], 1

</llo_original>
